<compile_context>
chip_gen: v7x
topology: tpu7x:2x2x1
jax: 0.10.0
libtpu: 0.0.40
codegen_flags: <defaults>
</compile_context>

<pallas_src>
import jax
import jax.numpy as jnp
from jax.experimental import pallas as pl
from jax.experimental.pallas import tpu as pltpu


def _round_up(x, m):
    return ((x + m - 1) // m) * m


def adv_domain_cls_kernel(x_ref, w_ref, b_ref, o_ref):
    # GradRevLayer: identity in the forward pass (only flips grads backward).
    # fc1: bf16 x @ bf16 w on the MXU with f32 accumulation.
    y = jnp.dot(x_ref[...], w_ref[...], preferred_element_type=jnp.float32)
    y = y + b_ref[...]          # bias add in f32 (VPU)
    y = jnp.maximum(y, 0.0)     # ReLU (VPU)
    # TODO(synk): nn.Dropout is identity at inference; training-mode dropout
    # (random mask + 1/(1-p) scale) and the gradient-reversal backward
    # (custom_vjp scaling grads by -beta) are intentionally not implemented.
    o_ref[...] = y.astype(o_ref.dtype)


def adv_domain_cls_base(x, w, b, beta=1.0, *, max_tile_n=256):
    """Forward pass of AdvDomainClsBase.

    x: (N, in_feat) f32
    w: (in_feat, hidden) f32   (transposed vs. PyTorch's (hidden, in_feat))
    b: (hidden,) or (1, hidden) f32
    beta: gradient-reversal strength -- unused in the forward pass.
    """
    del beta  # only affects the backward pass (gradient reversal)
    n, in_feat = x.shape
    hidden = w.shape[1]
    out_dtype = x.dtype

    if b.ndim == 1:
        b = b[None, :]

    # Lane-dense output: pad hidden to a multiple of 128.
    hidden_p = _round_up(hidden, 128)
    # MXU-aligned row tile (multiple of 16 for bf16 sublane packing); small
    # batches collapse to a single block.
    tile_n = min(max_tile_n, _round_up(n, 16))
    n_p = _round_up(n, tile_n)

    # bf16 inputs halve HBM traffic / resident-weight VMEM; accumulate in f32.
    x_lo = x.astype(jnp.bfloat16)
    w_lo = w.astype(jnp.bfloat16)
    b_f32 = b.astype(jnp.float32)

    if n_p != n:
        x_lo = jnp.pad(x_lo, ((0, n_p - n), (0, 0)))
    if hidden_p != hidden:
        # Zero-padded weight/bias columns => padded outputs are ReLU(0) = 0
        # and get sliced off below, so the result is exact.
        w_lo = jnp.pad(w_lo, ((0, 0), (0, hidden_p - hidden)))
        b_f32 = jnp.pad(b_f32, ((0, 0), (0, hidden_p - hidden)))

    # VMEM budget: resident weight + bias + double-buffered x / out tiles.
    # TODO(synk): for very large in_feat (weight no longer VMEM-resident on
    # v7x's 64 MiB), add a K grid axis with an f32 accumulator scratch.
    vmem_bytes = (
        in_feat * hidden_p * 2            # weight (bf16), fetched once
        + hidden_p * 4                    # bias (f32)
        + 2 * tile_n * in_feat * 2        # double-buffered x tiles (bf16)
        + 2 * tile_n * hidden_p * 4       # double-buffered out tiles (f32)
    )
    vmem_limit = int(min(64 * 2**20, max(2 * vmem_bytes, 4 * 2**20)))

    out_p = pl.pallas_call(
        adv_domain_cls_kernel,
        out_shape=jax.ShapeDtypeStruct((n_p, hidden_p), out_dtype),
        grid_spec=pltpu.PrefetchScalarGridSpec(
            num_scalar_prefetch=0,
            grid=(n_p // tile_n,),
            in_specs=[
                pl.BlockSpec((tile_n, in_feat), lambda i: (i, 0)),
                pl.BlockSpec((in_feat, hidden_p), lambda i: (0, 0)),
                pl.BlockSpec((1, hidden_p), lambda i: (0, 0)),
            ],
            out_specs=pl.BlockSpec((tile_n, hidden_p), lambda i: (i, 0)),
        ),
        compiler_params=pltpu.CompilerParams(
            # Row axis is independent -> lets v7x's two TensorCores split it.
            dimension_semantics=("parallel",),
            vmem_limit_bytes=vmem_limit,
        ),
    )(x_lo, w_lo, b_f32)

    # Slice away batch / hidden padding.
    return out_p[:n, :hidden]


if __name__ == "__main__":
    # Small shapes consistent with the module: a batch of feature vectors.
    N, IN_FEAT, HIDDEN = 16, 32, 32

    key = jax.random.PRNGKey(0)
    kx, kw, kb = jax.random.split(key, 3)

    x = jax.random.normal(kx, (N, IN_FEAT), dtype=jnp.float32)

    # Deterministic parameter init mimicking nn.Linear defaults:
    # U(-1/sqrt(in_feat), 1/sqrt(in_feat)) for weight and bias.
    bound = 1.0 / (IN_FEAT ** 0.5)
    w = jax.random.uniform(kw, (IN_FEAT, HIDDEN), jnp.float32, -bound, bound)
    b = jax.random.uniform(kb, (HIDDEN,), jnp.float32, -bound, bound)

    beta = 0.5  # gradient-reversal strength; forward is identity

    out = adv_domain_cls_base(x, w, b, beta)
    out = jax.block_until_ready(out)

    assert out.shape == (N, HIDDEN)

    # Reference matching the kernel's bf16-input / f32-accumulate path.
    ref_lo = jnp.maximum(
        jnp.dot(x.astype(jnp.bfloat16), w.astype(jnp.bfloat16),
                preferred_element_type=jnp.float32) + b[None, :], 0.0)
    # Loose check against pure-f32 math (bf16 inputs add ~1e-3 rel error).
    ref_f32 = jnp.maximum(x @ w + b[None, :], 0.0)

    assert jnp.allclose(out, ref_lo, atol=1e-3, rtol=1e-3)
    assert jnp.allclose(out, ref_f32, atol=2e-2, rtol=2e-2)

    print("KERNEL_OK")
</pallas_src>

<mosaic_0001>
module attributes {stable_mosaic.version = 11 : i64} {
  func.func @adv_domain_cls_kernel(%arg0: i32, %arg1: memref<16x32xbf16, #tpu.memory_space<vmem>>, %arg2: memref<32x128xbf16, #tpu.memory_space<vmem>>, %arg3: memref<1x128xf32, #tpu.memory_space<vmem>>, %arg4: memref<16x128xf32, #tpu.memory_space<vmem>>) attributes {dimension_semantics = [#tpu.dimension_semantics<parallel>], iteration_bounds = array<i64: 1>, scalar_prefetch = 0 : i64, scratch_operands = 0 : i64, tpu.core_type = #tpu.core_type<tc>, window_params = [{transform_indices = @transform_0, window_bounds = array<i64: 16, 32>}, {pipeline_mode = #tpu.pipeline_mode<synchronous>, transform_indices = @transform_1, window_bounds = array<i64: 32, 128>}, {pipeline_mode = #tpu.pipeline_mode<synchronous>, transform_indices = @transform_2, window_bounds = array<i64: 1, 128>}, {transform_indices = @transform_3, window_bounds = array<i64: 16, 128>}]} {
    %c0 = arith.constant 0 : index
    %c0_0 = arith.constant 0 : index
    %0 = vector.load %arg1[%c0, %c0_0] : memref<16x32xbf16, #tpu.memory_space<vmem>>, vector<16x32xbf16>
    %c0_1 = arith.constant 0 : index
    %c0_2 = arith.constant 0 : index
    %1 = vector.load %arg2[%c0_1, %c0_2] : memref<32x128xbf16, #tpu.memory_space<vmem>>, vector<32x128xbf16>
    %cst = arith.constant dense<0.000000e+00> : vector<16x128xf32>
    %2 = tpu.matmul %0, %1, %cst {dimension_numbers = #tpu.dot_dimension_numbers<[1], [0], [0], [1], [0, 0, 1, 1], [], []>} : vector<16x32xbf16>, vector<32x128xbf16>, vector<16x128xf32> -> vector<16x128xf32>
    %c0_3 = arith.constant 0 : index
    %c0_4 = arith.constant 0 : index
    %3 = vector.load %arg3[%c0_3, %c0_4] : memref<1x128xf32, #tpu.memory_space<vmem>>, vector<1x128xf32>
    %4 = vector.broadcast %3 : vector<1x128xf32> to vector<16x128xf32>
    %5 = arith.addf %2, %4 : vector<16x128xf32>
    %cst_5 = arith.constant 0.000000e+00 : f32
    %6 = vector.broadcast %cst_5 : f32 to vector<16x128xf32>
    %7 = arith.maximumf %5, %6 : vector<16x128xf32>
    %c0_6 = arith.constant 0 : index
    %c0_7 = arith.constant 0 : index
    %8 = vector.load %arg4[%c0_6, %c0_7] : memref<16x128xf32, #tpu.memory_space<vmem>>, vector<16x128xf32>
    tpu.vector_store %arg4[%c0_6, %c0_7], %7 {strides = array<i32>} : memref<16x128xf32, #tpu.memory_space<vmem>>, vector<16x128xf32>,
    return
  }
  func.func @transform_0(%arg0: i32) -> (i32, i32) {
    %c0_i32 = arith.constant 0 : i32
    %c0_i32_0 = arith.constant 0 : i32
    return %arg0, %c0_i32 : i32, i32
  }
  func.func @transform_1(%arg0: i32) -> (i32, i32) {
    %c0_i32 = arith.constant 0 : i32
    %c0_i32_0 = arith.constant 0 : i32
    %c0_i32_1 = arith.constant 0 : i32
    return %c0_i32, %c0_i32_0 : i32, i32
  }
  func.func @transform_2(%arg0: i32) -> (i32, i32) {
    %c0_i32 = arith.constant 0 : i32
    %c0_i32_0 = arith.constant 0 : i32
    %c0_i32_1 = arith.constant 0 : i32
    return %c0_i32, %c0_i32_0 : i32, i32
  }
  func.func @transform_3(%arg0: i32) -> (i32, i32) {
    %c0_i32 = arith.constant 0 : i32
    %c0_i32_0 = arith.constant 0 : i32
    return %arg0, %c0_i32 : i32, i32
  }
}

</mosaic_0001>

<llo_original>
// kernel: tpu_custom_call.1
$region0: #{tpu_custom_call.1}
  #allocation0 [shape = 'u32[]', space=smem, size = 0x4, offset = 0x4, fixed_abs, tag = 'smem constant byte address 0x4 - core index']
  #allocation1 [shape = 'u32[144,128]{1,0:T(1,128)}', space=vmem, size = 0x12000, scoped, tag = 'internal scratch']
  %s0 = inlined_call_operand.hbm [shape: bf16[16,32], index: 0, kind: input, shape index: {}]
  %s1 = inlined_call_operand.hbm [shape: bf16[32,128], index: 1, kind: input, shape index: {}]
  %s2 = inlined_call_operand.vmem [shape: f32[1,128], index: 2, kind: input, shape index: {}]
  %s3 = inlined_call_operand.hbm [shape: f32[16,128], index: 3, kind: output, shape index: {}]
  %s4 = sld [smem:[#allocation0]]
  $region30: #{tpu_custom_call.1} parent=0
    _
  %s6 = ssub.s32 1, %s4
  %s7 = scalar_select 0, %s6, %s4
  $region1: #{tpu_custom_call.1} parent=0
    #allocation2 [shape = 'u8[4096]{0}', space=vmem, size = 0x1000, scoped, tag = 'input window, operand 0, single buffered']
    #allocation3 [shape = 's32[1]{0}', space=sflag, size = 0x4, scoped, tag = 'scoped memory for tpu_custom_call.1']
    #allocation4 [shape = 's32[1]{0}', space=sflag, size = 0x4, scoped, tag = 'scoped memory for tpu_custom_call.1']
    #allocation5 [shape = 'u8[8192]{0}', space=vmem, size = 0x2000, scoped, tag = 'input window, operand 1, single buffered']
    #allocation6 [shape = 's32[1]{0}', space=sflag, size = 0x4, scoped, tag = 'scoped memory for tpu_custom_call.1']
    #allocation7 [shape = 'u8[8192]{0}', space=vmem, size = 0x2000, scoped, tag = 'output window, operand 0, single buffered']
    %8 = vsyncpa [#allocation3], 0
    %9 = vsyncpa [#allocation6], 0
    %10 = vsyncpa [#allocation4], 0
    // Predicated region
    $region2: #{tpu_custom_call.1} parent=1 // pred_check
      _
    $region3: #{tpu_custom_call.1} parent=1 // pred_check_branch
      %12 = sbr.rel (0) target = $region5
    $region4: #{tpu_custom_call.1} parent=1 // pred_region
      %s14 = ssub.s32 128, 128
      %15 = vsyncadd [#allocation3], %s14
      %s16 = sshll.u32 [#allocation2], 4
      %s17 = int_to_ptr.vmem [resolvable:$true] %s16
      %22 = dma.hbm_to_vmem [thread:$0]  %s0, 128, %s17, [#allocation3], 64, 64, 4
    $region5: #{tpu_custom_call.1} parent=1 // pred_fallthru
      _
    // Predicated region
    $region6: #{tpu_custom_call.1} parent=1 // pred_check
      _
    $region7: #{tpu_custom_call.1} parent=1 // pred_check_branch
      %24 = sbr.rel (0) target = $region9
    $region8: #{tpu_custom_call.1} parent=1 // pred_region
      %s26 = ssub.s32 256, 256
      %27 = vsyncadd [#allocation6], %s26
      %s28 = sshll.u32 [#allocation5], 4
      %s29 = int_to_ptr.vmem [resolvable:$true] %s28
      %34 = dma.hbm_to_vmem [thread:$0]  %s1, 256, %s29, [#allocation6], 64, 64, 4
    $region9: #{tpu_custom_call.1} parent=1 // pred_fallthru
      _
    // Predicated region
    $region10: #{tpu_custom_call.1} parent=1 // pred_check
      _
    $region11: #{tpu_custom_call.1} parent=1 // pred_check_branch
      %36 = sbr.rel (0) target = $region13
    $region12: #{tpu_custom_call.1} parent=1 // pred_region
      _
    $region13: #{tpu_custom_call.1} parent=1 // pred_fallthru
      _
    // Predicated region
    $region14: #{tpu_custom_call.1} parent=1 // pred_check
      _
    $region15: #{tpu_custom_call.1} parent=1 // pred_check_branch
      %38 = sbr.rel (0) target = $region17
    $region16: #{tpu_custom_call.1} parent=1 // pred_region
      %39 = dma.done [#allocation3], 128
    $region17: #{tpu_custom_call.1} parent=1 // pred_fallthru
      _
    // Predicated region
    $region18: #{tpu_custom_call.1} parent=1 // pred_check
      _
    $region19: #{tpu_custom_call.1} parent=1 // pred_check_branch
      %41 = sbr.rel (0) target = $region21
    $region20: #{tpu_custom_call.1} parent=1 // pred_region
      %42 = dma.done [#allocation6], 256
    $region21: #{tpu_custom_call.1} parent=1 // pred_fallthru
      _
    %v44 = vld [vmem:[#allocation2] sm:$0xf]
    %v45 = vld [vmem:[#allocation2 + $0x4] sm:$0xf]
    %v46 = vld [vmem:[#allocation5] sm:$0xf]
    %v47 = vld [vmem:[#allocation5 + $0x4] sm:$0xf]
    %v48 = vld [vmem:[#allocation5 + $0x8] sm:$0xf]
    %v49 = vld [vmem:[#allocation5 + $0xc] sm:$0xf]
    %v50 = vld [vmem:[%s2] sm:$0x1]
    %v52 = vlaneseq
    %v53 = vshrl.u32 %v52, 7
    %v54 = vsub.s32 0, %v53
    %v55 = vrot.slane %v50, %v54
    %v59 = vunpack.c.l.b16 %v44
    %v60 = vunpack.c.l.b16 %v45
    %v61 = vpack.c.b16 %v60, %v59
    %v66 = vunpack.c.l.b16 %v46
    %v67 = vunpack.c.l.b16 %v47
    %v68 = vunpack.c.l.b16 %v48
    %v69 = vunpack.c.l.b16 %v49
    %v70 = vpack.c.b16 %v67, %v66
    %v71 = vpack.c.b16 %v69, %v68
    %vm74 = vcmask 261120
    %v76 = vsel %vm74, %v61, 0
    %78 = vmatprep.subr.bf16.mxu0 0
    %79 = vmatpush1.bf16.msra.mxu0 %v70
    %80 = vmatprep.subr.bf16.mxu0 0
    %81 = vmatpush1.bf16.msra.mxu0 %v71
    %82 = vmatprep.subr.bf16.mxu0 0
    %83 = vmatpush1.bf16.msra.mxu0 0
    %84 = vmatprep.subr.bf16.mxu0 0
    %85 = vmatpush1.bf16.msra.mxu0 0
    %86 = vmatprep.subr.bf16.mxu0 0
    %87 = vmatpush1.bf16.msra.mxu0 0
    %88 = vmatprep.subr.bf16.mxu0 0
    %89 = vmatpush1.bf16.msra.mxu0 0
    %90 = vmatprep.subr.bf16.mxu0 0
    %91 = vmatpush1.bf16.msra.mxu0 0
    %92 = vmatprep.subr.bf16.mxu0 0
    %93 = vmatpush1.bf16.msra.mxu0 0
    %94 = vmatprep.subr.bf16.mxu0 0
    %95 = vmatpush1.bf16.msra.mxu0 0
    %96 = vmatprep.subr.bf16.mxu0 0
    %97 = vmatpush1.bf16.msra.mxu0 0
    %98 = vmatprep.subr.bf16.mxu0 0
    %99 = vmatpush1.bf16.msra.mxu0 0
    %100 = vmatprep.subr.bf16.mxu0 0
    %101 = vmatpush1.bf16.msra.mxu0 0
    %102 = vmatprep.subr.bf16.mxu0 0
    %103 = vmatpush1.bf16.msra.mxu0 0
    %104 = vmatprep.subr.bf16.mxu0 0
    %105 = vmatpush1.bf16.msra.mxu0 0
    %106 = vmatprep.subr.bf16.mxu0 0
    %107 = vmatpush1.bf16.msra.mxu0 0
    %108 = vmatprep.subr.bf16.mxu0 0
    %109 = vmatpush1.bf16.msra.mxu0 0
    %110 = vmatprep.mubr.bf16.mxu0 0
    %111 = vmatmul.mubr.bf16.gmra.mrb[0].mxu0 %v76
    %v112 = vpop.f32.mrb[0].mxu0
    %v113 = vadd.f32 %v55, %v112
    %v114 = vpop.f32.mrb[0].mxu0
    %v115 = vpop.f32.mrb[0].mxu0
    %v116 = vadd.f32 %v55, %v115
    %v117 = vpop.f32.mrb[0].mxu0
    %118 = vdwg.mxu0
    %v119 = vmax.f32 %v113, 0.0
    %v120 = vmax.f32 %v116, 0.0
    %121 = vst [vmem:[#allocation7] sm:$0xff] %v119
    %122 = vst [vmem:[#allocation7 + $0x8] sm:$0xff] %v120
    // Predicated region
    $region22: #{tpu_custom_call.1} parent=1 // pred_check
      _
    $region23: #{tpu_custom_call.1} parent=1 // pred_check_branch
      %124 = sbr.rel (0) target = $region25
    $region24: #{tpu_custom_call.1} parent=1 // pred_region
      %s126 = ssub.s32 256, 256
      %127 = vsyncadd [#allocation4], %s126
      %s128 = sshll.u32 [#allocation7], 4
      %s129 = int_to_ptr.vmem [resolvable:$true] %s128
      %134 = dma.vmem_to_hbm [thread:$0]  %s129, 256, %s3, [#allocation4], 128, 128, 8
    $region25: #{tpu_custom_call.1} parent=1 // pred_fallthru
      _
    // Predicated region
    $region26: #{tpu_custom_call.1} parent=1 // pred_check
      _
    $region27: #{tpu_custom_call.1} parent=1 // pred_check_branch
      %136 = sbr.rel (0) target = $region29
    $region28: #{tpu_custom_call.1} parent=1 // pred_region
      %137 = dma.done [#allocation4], 256
    $region29: #{tpu_custom_call.1} parent=1 // pred_fallthru
      _
    %138 = vsyncpa [#allocation3], 1
    %139 = vsyncpa [#allocation6], 1
    %140 = vsyncpa [#allocation4], 1

</llo_original>
